<compile_context>
chip_gen: v6e
topology: v6e:2x2x1
jax: 0.10.0
libtpu: 0.0.40
codegen_flags: <defaults>
</compile_context>

<pallas_src>
import math

import jax
import jax.numpy as jnp
import numpy as np
from jax.experimental import pallas as pl
from jax.experimental.pallas import tpu as pltpu


def sinusoidal_pos_encoding(context_len, embed_dim):
    """Matches PositionalEncodingLayer.construct_pos_encoding (sin on even
    columns, cos on odd columns).  Rows do not depend on context_len, so
    slicing this buffer also reproduces the adaptive_encoding=True branch."""
    position = np.arange(context_len, dtype=np.float32)[:, None]
    div_term = np.exp(
        np.arange(0, embed_dim, 2, dtype=np.float32)
        * (-math.log(10000.0) / embed_dim)
    )
    pe = np.zeros((context_len, embed_dim), dtype=np.float32)
    pe[:, 0::2] = np.sin(position * div_term)
    n_odd = pe[:, 1::2].shape[1]
    pe[:, 1::2] = np.cos(position * div_term[:n_odd])
    return jnp.asarray(pe, dtype=jnp.float32)


def pos_encoding_kernel(x_ref, pos_ref, o_ref):
    # Broadcast-add the (per-position) encoding over the batch block, in f32,
    # then cast back to the activation dtype.
    o_ref[...] = (x_ref[...].astype(jnp.float32) + pos_ref[...]).astype(o_ref.dtype)
    # TODO(synk): nn.Dropout(p=0.1) is identity in eval mode; a training-mode
    # variant would apply pltpu.prng_seed + pltpu.stateful_bernoulli here.


def _physical_vmem_bytes():
    try:
        return int(pltpu.get_tpu_info().vmem_capacity_bytes)
    except Exception:
        return 64 << 20  # conservative fallback (v7x-sized VMEM)


_XBLOCK_CAP = 8 << 20  # diminishing returns past ~8 MiB per x block (mem-bound)


def positional_encoding_layer(x, pos_buffer):
    """x: (B, S, H); pos_buffer: (context_len, H) float32 with context_len >= S."""
    B, S, H = x.shape
    isz = x.dtype.itemsize
    pos = pos_buffer[:S].astype(jnp.float32)  # pos_encoding[:, :L], kept in f32

    phys = _physical_vmem_bytes()
    # Per-step footprint: 2*(x + out) double buffers + 2*pos buffers must fit
    # comfortably in VMEM (v7x only has 64 MiB physical).
    scoped_target = (phys * 5) // 8
    vmem_limit = int(min(phys - (4 << 20), scoped_target + (16 << 20)))
    cparams = pltpu.CompilerParams(
        dimension_semantics=("parallel", "parallel"),
        vmem_limit_bytes=vmem_limit,
    )

    if H % 128 == 0:
        # --- lane-dense hidden dim: (Bb, Sb, H) blocks ----------------------
        def fits(bb, sb):
            x_blk = bb * sb * H * isz
            pos_blk = sb * H * 4
            return x_blk <= _XBLOCK_CAP and 4 * x_blk + 2 * pos_blk <= scoped_target

        sb_cands = sorted({d for d in range(8, S + 1, 8) if S % d == 0} | {S})
        Sb = sb_cands[0]
        for cand in reversed(sb_cands):
            if fits(1, cand):
                Sb = cand
                break
        Bb = 1
        while B % (Bb * 2) == 0 and fits(Bb * 2, Sb):
            Bb *= 2
        # Prefer an even step count (balances v7x's two TensorCores) when it
        # only costs halving an already-grown batch tile.
        steps = (S // Sb) * (B // Bb)
        if steps > 1 and steps % 2 == 1 and Bb % 2 == 0:
            Bb //= 2

        # Batch is the innermost grid axis: the pos block index is constant
        # across it, so its DMA is issued only once per sequence tile.
        grid = (S // Sb, B // Bb)
        return pl.pallas_call(
            pos_encoding_kernel,
            out_shape=jax.ShapeDtypeStruct((B, S, H), x.dtype),
            grid_spec=pltpu.PrefetchScalarGridSpec(
                num_scalar_prefetch=0,
                grid=grid,
                in_specs=[
                    pl.BlockSpec((Bb, Sb, H), lambda s, b: (b, s, 0)),  # x
                    pl.BlockSpec((Sb, H), lambda s, b: (s, 0)),         # pos enc
                ],
                out_specs=pl.BlockSpec((Bb, Sb, H), lambda s, b: (b, s, 0)),
            ),
            compiler_params=cparams,
            input_output_aliases={0: 0},  # write output in place of x
        )(x, pos)

    # --- lane-sparse hidden dim (H < 128 or not a multiple of 128) ----------
    # Collapse (S, H) into one trailing dim so the output block's last dim is a
    # large multiple of 128 (or the full extent): unmasked full-lane stores.
    C = S * H
    x2 = x.reshape(B, C)
    pos2 = pos.reshape(1, C)

    def fits(bb, cb):
        x_blk = bb * cb * isz
        pos_blk = cb * 4
        return x_blk <= _XBLOCK_CAP and 4 * x_blk + 2 * pos_blk <= scoped_target

    cb_cands = sorted({d for d in range(128, C + 1, 128) if C % d == 0} | {C})
    bb_cands = sorted({d for d in range(8, B + 1, 8) if B % d == 0}) or [B]
    Bb = bb_cands[0]
    Cb = cb_cands[0]
    for cand in reversed(cb_cands):
        if fits(Bb, cand):
            Cb = cand
            break
    for cand in bb_cands:
        if fits(cand, Cb):
            Bb = cand

    grid = (C // Cb, B // Bb)  # batch innermost -> pos block DMA'd once per col tile
    out2 = pl.pallas_call(
        pos_encoding_kernel,
        out_shape=jax.ShapeDtypeStruct((B, C), x.dtype),
        grid_spec=pltpu.PrefetchScalarGridSpec(
            num_scalar_prefetch=0,
            grid=grid,
            in_specs=[
                pl.BlockSpec((Bb, Cb), lambda c, b: (b, c)),  # x (flattened)
                pl.BlockSpec((1, Cb), lambda c, b: (0, c)),   # pos enc (flattened)
            ],
            out_specs=pl.BlockSpec((Bb, Cb), lambda c, b: (b, c)),
        ),
        compiler_params=cparams,
        input_output_aliases={0: 0},
    )(x2, pos2)
    return out2.reshape(B, S, H)


if __name__ == "__main__":
    key = jax.random.PRNGKey(0)
    k1, k2 = jax.random.split(key)

    CONTEXT_LEN = 16

    # Lane-sparse path (hidden dim not a multiple of 128), shapes implied by
    # the module: (batch, seq, hidden) plus a longer positional buffer.
    B, S, H = 2, 8, 32
    x_a = jax.random.normal(k1, (B, S, H), jnp.float32)
    pos_a = sinusoidal_pos_encoding(CONTEXT_LEN, H)
    ref_a = x_a + pos_a[None, :S, :]
    out_a = jax.block_until_ready(positional_encoding_layer(x_a, pos_a))
    assert out_a.shape == (B, S, H)
    assert jnp.allclose(out_a, ref_a, atol=1e-6, rtol=1e-6)

    # Lane-dense path (hidden dim a multiple of 128).
    B2, S2, H2 = 2, 8, 128
    x_b = jax.random.normal(k2, (B2, S2, H2), jnp.float32)
    pos_b = sinusoidal_pos_encoding(CONTEXT_LEN, H2)
    ref_b = x_b + pos_b[None, :S2, :]
    out_b = jax.block_until_ready(positional_encoding_layer(x_b, pos_b))
    assert out_b.shape == (B2, S2, H2)
    assert jnp.allclose(out_b, ref_b, atol=1e-6, rtol=1e-6)

    print("KERNEL_OK")
</pallas_src>

<mosaic_0001>
module attributes {stable_mosaic.version = 11 : i64} {
  func.func @pos_encoding_kernel(%arg0: i32, %arg1: i32, %arg2: memref<2x256xf32, #tpu.memory_space<vmem>>, %arg3: memref<1x256xf32, #tpu.memory_space<vmem>>, %arg4: memref<2x256xf32, #tpu.memory_space<vmem>>) attributes {dimension_semantics = [#tpu.dimension_semantics<parallel>, #tpu.dimension_semantics<parallel>], iteration_bounds = array<i64: 1, 1>, scalar_prefetch = 0 : i64, scratch_operands = 0 : i64, tpu.core_type = #tpu.core_type<tc>, window_params = [{transform_indices = @transform_0, window_bounds = array<i64: 2, 256>}, {transform_indices = @transform_1, window_bounds = array<i64: 1, 256>}, {transform_indices = @transform_2, window_bounds = array<i64: 2, 256>}]} {
    %c0 = arith.constant 0 : index
    %c0_0 = arith.constant 0 : index
    %0 = vector.load %arg2[%c0, %c0_0] : memref<2x256xf32, #tpu.memory_space<vmem>>, vector<2x256xf32>
    %c0_1 = arith.constant 0 : index
    %c0_2 = arith.constant 0 : index
    %1 = vector.load %arg3[%c0_1, %c0_2] : memref<1x256xf32, #tpu.memory_space<vmem>>, vector<1x256xf32>
    %2 = vector.broadcast %1 : vector<1x256xf32> to vector<2x256xf32>
    %3 = arith.addf %0, %2 : vector<2x256xf32>
    %c0_3 = arith.constant 0 : index
    %c0_4 = arith.constant 0 : index
    %4 = vector.load %arg4[%c0_3, %c0_4] : memref<2x256xf32, #tpu.memory_space<vmem>>, vector<2x256xf32>
    tpu.vector_store %arg4[%c0_3, %c0_4], %3 {strides = array<i32>} : memref<2x256xf32, #tpu.memory_space<vmem>>, vector<2x256xf32>,
    return
  }
  func.func @transform_0(%arg0: i32, %arg1: i32) -> (i32, i32) {
    %c0_i32 = arith.constant 0 : i32
    return %arg1, %arg0 : i32, i32
  }
  func.func @transform_1(%arg0: i32, %arg1: i32) -> (i32, i32) {
    %c0_i32 = arith.constant 0 : i32
    %c0_i32_0 = arith.constant 0 : i32
    return %c0_i32, %arg0 : i32, i32
  }
  func.func @transform_2(%arg0: i32, %arg1: i32) -> (i32, i32) {
    %c0_i32 = arith.constant 0 : i32
    return %arg1, %arg0 : i32, i32
  }
}

</mosaic_0001>

<llo_original>
// kernel: tpu_custom_call.1
$region0: #{tpu_custom_call.1}
  #allocation0 [shape = 'u32[]', space=smem, size = 0x4, offset = 0x4, fixed_abs, tag = 'smem constant byte address 0x4 - core index']
  #allocation1 [shape = 'u32[144,128]{1,0:T(1,128)}', space=vmem, size = 0x12000, scoped, tag = 'internal scratch']
  %s0 = inlined_call_operand.hbm [shape: f32[2,256], index: 0, kind: input, shape index: {}, may-alias: {0,2}]
  %s1 = inlined_call_operand.vmem [shape: f32[1,256], index: 1, kind: input, shape index: {}]
  %s2 = inlined_call_operand.hbm [shape: f32[2,256], index: 2, kind: output, shape index: {}, may-alias: {0,2}]
  %s3 = sld [smem:[#allocation0]]
  $region22: #{tpu_custom_call.1} parent=0
    _
  %s5 = ssub.s32 1, %s3
  %s6 = scalar_select 0, %s5, %s3
  $region1: #{tpu_custom_call.1} parent=0
    #allocation2 [shape = 'u8[2048]{0}', space=vmem, size = 0x800, scoped, tag = 'input window, operand 0, single buffered']
    #allocation3 [shape = 's32[1]{0}', space=sflag, size = 0x4, scoped, tag = 'scoped memory for tpu_custom_call.1']
    #allocation4 [shape = 's32[1]{0}', space=sflag, size = 0x4, scoped, tag = 'scoped memory for tpu_custom_call.1']
    #allocation5 [shape = 'u8[2048]{0}', space=vmem, size = 0x800, scoped, tag = 'output window, operand 0, single buffered']
    %7 = vsyncpa [#allocation3], 0
    %8 = vsyncpa [#allocation4], 0
    // Predicated region
    $region2: #{tpu_custom_call.1} parent=1 // pred_check
      _
    $region3: #{tpu_custom_call.1} parent=1 // pred_check_branch
      %10 = sbr.rel (0) target = $region5
    $region4: #{tpu_custom_call.1} parent=1 // pred_region
      %s12 = ssub.s32 64, 64
      %13 = vsyncadd [#allocation3], %s12
      %s15 = sshll.u32 [#allocation2], 4
      %s16 = int_to_ptr.vmem [resolvable:$true] %s15
      %18 = dma.hbm_to_vmem [thread:$0]  %s0, 64, %s16, [#allocation3]
    $region5: #{tpu_custom_call.1} parent=1 // pred_fallthru
      _
    // Predicated region
    $region6: #{tpu_custom_call.1} parent=1 // pred_check
      _
    $region7: #{tpu_custom_call.1} parent=1 // pred_check_branch
      %20 = sbr.rel (0) target = $region9
    $region8: #{tpu_custom_call.1} parent=1 // pred_region
      _
    $region9: #{tpu_custom_call.1} parent=1 // pred_fallthru
      _
    // Predicated region
    $region10: #{tpu_custom_call.1} parent=1 // pred_check
      _
    $region11: #{tpu_custom_call.1} parent=1 // pred_check_branch
      %22 = sbr.rel (0) target = $region13
    $region12: #{tpu_custom_call.1} parent=1 // pred_region
      %23 = dma.done [#allocation3], 64
    $region13: #{tpu_custom_call.1} parent=1 // pred_fallthru
      _
    %v24 = vld [vmem:[#allocation2] sm:$0xf]
    %v25 = vld [vmem:[%s1] sm:$0x3]
    %v27 = vlaneseq
    %v28 = vshrl.u32 %v27, 7
    %v29 = vsub.s32 0, %v28
    %v30 = vrot.slane %v25, %v29
    %v31 = vlaneseq
    %v32 = vshrl.u32 %v31, 7
    %v33 = vsub.s32 1, %v32
    %v34 = vrot.slane %v25, %v33
    %v35 = vcombine.low %v30, %v34
    %v37 = vunpack.c.l.s4 1983009808
    %v38 = vunpack.c.0.s8 %v37
    %v39 = vlaneseq
    %v40 = vshrl.u32 %v39, 7
    %v41 = vsub.s32 %v38, %v40
    %v42 = vrot.slane %v35, %v41
    %v44 = vadd.f32 %v24, %v42
    %45 = vst [vmem:[#allocation5] sm:$0xf] %v44
    // Predicated region
    $region14: #{tpu_custom_call.1} parent=1 // pred_check
      _
    $region15: #{tpu_custom_call.1} parent=1 // pred_check_branch
      %47 = sbr.rel (0) target = $region17
    $region16: #{tpu_custom_call.1} parent=1 // pred_region
      %s49 = ssub.s32 64, 64
      %50 = vsyncadd [#allocation4], %s49
      %s52 = sshll.u32 [#allocation5], 4
      %s53 = int_to_ptr.vmem [resolvable:$true] %s52
      %55 = dma.vmem_to_hbm [thread:$0]  %s53, 64, %s2, [#allocation4]
    $region17: #{tpu_custom_call.1} parent=1 // pred_fallthru
      _
    // Predicated region
    $region18: #{tpu_custom_call.1} parent=1 // pred_check
      _
    $region19: #{tpu_custom_call.1} parent=1 // pred_check_branch
      %57 = sbr.rel (0) target = $region21
    $region20: #{tpu_custom_call.1} parent=1 // pred_region
      %58 = dma.done [#allocation4], 64
    $region21: #{tpu_custom_call.1} parent=1 // pred_fallthru
      _
    %59 = vsyncpa [#allocation3], 1
    %60 = vsyncpa [#allocation4], 1

</llo_original>
